<compile_context>
chip_gen: v5e
topology: v5e:2x2
jax: 0.10.0
libtpu: 0.0.40
codegen_flags: <defaults>
</compile_context>

<pallas_src>
import jax
import jax.numpy as jnp
from jax.experimental import pallas as pl
from jax.experimental.pallas import tpu as pltpu

SCALE = 0.3452390219632011
CLAMP_HI = 0.760402547351158
CLAMP_LO = -0.42610920540287


def _kernel_flat(x_ref, o_ref):
    # x_ref: (tb, L) tile, L = H*W (lane-dense, full last-dim extent).
    x = x_ref[...]
    mean = jnp.mean(x, axis=-1, keepdims=True)   # (tb, 1) per-image-channel mean
    y = x * (SCALE / mean)                       # 2x/mean(2x) == x/mean(x)
    o_ref[...] = jnp.maximum(jnp.minimum(y, CLAMP_HI), CLAMP_LO)


def _block_budget():
    """Per-chip (block_cap_bytes, vmem_limit_bytes)."""
    cap = 4 * 1024 * 1024          # safe on v7x (64 MiB physical / 32 MiB scoped)
    vmem_limit = 32 * 1024 * 1024
    try:
        info = pltpu.get_tpu_info()
        vmem_cap = getattr(info, "vmem_capacity_bytes", None)
        if vmem_cap is not None and vmem_cap >= 100 * 1024 * 1024:
            # v5e / v6e: 128 MiB physical VMEM -> bigger streaming blocks.
            cap = 8 * 1024 * 1024
            vmem_limit = 64 * 1024 * 1024
    except Exception:
        pass
    return cap, vmem_limit


def _pick_row_tile(R, L, cap_bytes):
    """Row tile for the flat (R, L) fp32 layout, or None if even 8 rows of L
    would blow the per-block budget (large-spatial fallback)."""
    row_bytes = 4 * L
    max_rows = cap_bytes // max(row_bytes, 1)
    if max_rows >= R:
        return R                      # whole array in one block (full extent)
    if max_rows >= 8:
        return (max_rows // 8) * 8    # multiple of 8, capped by budget
    return None                       # a single 8-row block would not fit


def _reference(x):
    v1 = x + x
    v2 = jnp.mean(v1, axis=(-2, -1), keepdims=True)
    v4 = (v1 / v2) * SCALE
    return jnp.maximum(jnp.minimum(v4, CLAMP_HI), CLAMP_LO)


def model_forward(x):
    """x: (N, C, H, W) float32 -> (N, C, H, W) float32."""
    N, C, H, W = x.shape
    L = H * W
    R = N * C

    cap_bytes, vmem_limit = _block_budget()
    tb = _pick_row_tile(R, L, cap_bytes)
    if tb is None:
        # TODO(synk): add a tiled-L two-pass Pallas path for very large H*W;
        # for now fall back to plain XLA so we never emit an un-fittable block.
        return _reference(x)

    cost = pl.CostEstimate(
        flops=3 * R * L,
        transcendentals=0,
        bytes_accessed=8 * R * L,
    )

    spec = pl.BlockSpec((tb, L), lambda i: (i, 0))
    out = pl.pallas_call(
        _kernel_flat,
        out_shape=jax.ShapeDtypeStruct((R, L), x.dtype),
        grid_spec=pltpu.PrefetchScalarGridSpec(
            num_scalar_prefetch=0,
            grid=(pl.cdiv(R, tb),),
            in_specs=[spec],
            out_specs=spec,
        ),
        compiler_params=pltpu.CompilerParams(
            dimension_semantics=("parallel",),
            vmem_limit_bytes=vmem_limit,
        ),
        cost_estimate=cost,
    )(x.reshape(R, L))
    return out.reshape(N, C, H, W)


if __name__ == "__main__":
    key = jax.random.PRNGKey(0)

    # Primary small shape (flat path: R = 8, L = 256).
    x = jax.random.normal(key, (2, 4, 16, 16), dtype=jnp.float32)
    out = jax.block_until_ready(model_forward(x))
    ref = _reference(x)
    assert out.shape == x.shape
    assert jnp.allclose(out, ref, atol=1e-5, rtol=1e-5)

    # Original module shape (1, 3, 48, 48): full-extent (3, 2304) block.
    x2 = jax.random.normal(jax.random.PRNGKey(1), (1, 3, 48, 48), dtype=jnp.float32)
    out2 = jax.block_until_ready(model_forward(x2))
    assert jnp.allclose(out2, _reference(x2), atol=1e-5, rtol=1e-5)

    # L not a multiple of 128 (H*W = 192): same flat path, full-extent last dim.
    x3 = jax.random.normal(jax.random.PRNGKey(2), (2, 4, 8, 24), dtype=jnp.float32)
    out3 = jax.block_until_ready(model_forward(x3))
    assert jnp.allclose(out3, _reference(x3), atol=1e-5, rtol=1e-5)

    print("KERNEL_OK")
</pallas_src>

<mosaic_0001>
module attributes {stable_mosaic.version = 11 : i64} {
  func.func @_kernel_flat(%arg0: i32, %arg1: memref<8x256xf32, #tpu.memory_space<vmem>>, %arg2: memref<8x256xf32, #tpu.memory_space<vmem>>) attributes {dimension_semantics = [#tpu.dimension_semantics<parallel>], iteration_bounds = array<i64: 1>, scalar_prefetch = 0 : i64, scratch_operands = 0 : i64, tpu.core_type = #tpu.core_type<tc>, window_params = [{transform_indices = @transform_0, window_bounds = array<i64: 8, 256>}, {transform_indices = @transform_1, window_bounds = array<i64: 8, 256>}]} {
    %c0 = arith.constant 0 : index
    %c0_0 = arith.constant 0 : index
    %0 = vector.load %arg1[%c0, %c0_0] : memref<8x256xf32, #tpu.memory_space<vmem>>, vector<8x256xf32>
    %cst = arith.constant dense<0.000000e+00> : vector<8xf32>
    %1 = vector.multi_reduction <add>, %0, %cst [1] : vector<8x256xf32> to vector<8xf32>
    %2 = vector.shape_cast %1 : vector<8xf32> to vector<8x1xf32>
    %cst_1 = arith.constant 2.560000e+02 : f32
    %3 = vector.broadcast %cst_1 : f32 to vector<8x1xf32>
    %4 = arith.divf %2, %3 : vector<8x1xf32>
    %cst_2 = arith.constant 3.452390e-01 : f32
    %5 = vector.broadcast %cst_2 : f32 to vector<8x1xf32>
    %6 = arith.divf %5, %4 : vector<8x1xf32>
    %7 = vector.broadcast %6 : vector<8x1xf32> to vector<8x256xf32>
    %8 = arith.mulf %0, %7 : vector<8x256xf32>
    %cst_3 = arith.constant 0.76040256 : f32
    %9 = vector.broadcast %cst_3 : f32 to vector<8x256xf32>
    %10 = arith.minimumf %8, %9 : vector<8x256xf32>
    %cst_4 = arith.constant -0.426109195 : f32
    %11 = vector.broadcast %cst_4 : f32 to vector<8x256xf32>
    %12 = arith.maximumf %10, %11 : vector<8x256xf32>
    %c0_5 = arith.constant 0 : index
    %c0_6 = arith.constant 0 : index
    %13 = vector.load %arg2[%c0_5, %c0_6] : memref<8x256xf32, #tpu.memory_space<vmem>>, vector<8x256xf32>
    tpu.vector_store %arg2[%c0_5, %c0_6], %12 {strides = array<i32>} : memref<8x256xf32, #tpu.memory_space<vmem>>, vector<8x256xf32>,
    return
  }
  func.func @transform_0(%arg0: i32) -> (i32, i32) {
    %c0_i32 = arith.constant 0 : i32
    %c0_i32_0 = arith.constant 0 : i32
    return %arg0, %c0_i32 : i32, i32
  }
  func.func @transform_1(%arg0: i32) -> (i32, i32) {
    %c0_i32 = arith.constant 0 : i32
    %c0_i32_0 = arith.constant 0 : i32
    return %arg0, %c0_i32 : i32, i32
  }
}

</mosaic_0001>

<llo_original>
// kernel: tpu_custom_call.1
$region0: #{tpu_custom_call.1}
  #allocation0 [shape = 'u32[]', space=smem, size = 0x4, offset = 0x4, fixed_abs, tag = 'smem constant byte address 0x4 - core index']
  #allocation1 [shape = 'u32[72,128]{1,0:T(1,128)}', space=vmem, size = 0x9000, scoped, tag = 'internal scratch']
  %s0 = inlined_call_operand.hbm [shape: f32[8,256], index: 0, kind: input, shape index: {}]
  %s1 = inlined_call_operand.hbm [shape: f32[8,256], index: 1, kind: output, shape index: {}]
  %s2 = sld [smem:[#allocation0]]
  $region18: #{tpu_custom_call.1} parent=0
    _
  %s4 = ssub.s32 1, %s2
  %s5 = scalar_select 0, %s4, %s2
  $region1: #{tpu_custom_call.1} parent=0
    #allocation2 [shape = 'u8[8192]{0}', space=vmem, size = 0x2000, scoped, tag = 'input window, operand 0, single buffered']
    #allocation3 [shape = 's32[1]{0}', space=sflag, size = 0x4, scoped, tag = 'scoped memory for tpu_custom_call.1']
    #allocation4 [shape = 's32[1]{0}', space=sflag, size = 0x4, scoped, tag = 'scoped memory for tpu_custom_call.1']
    #allocation5 [shape = 'u8[8192]{0}', space=vmem, size = 0x2000, scoped, tag = 'output window, operand 0, single buffered']
    %6 = vsyncpa [#allocation3], 0
    %7 = vsyncpa [#allocation4], 0
    // Predicated region
    $region2: #{tpu_custom_call.1} parent=1 // pred_check
      _
    $region3: #{tpu_custom_call.1} parent=1 // pred_check_branch
      %9 = sbr.rel (0) target = $region5
    $region4: #{tpu_custom_call.1} parent=1 // pred_region
      %11 = vsyncadd [#allocation3], 0
      %s13 = sshll.u32 %s0, 4
      %s14 = int_to_ptr.hbm [resolvable:$true] %s13
      %s15 = sshll.u32 [#allocation2], 4
      %s16 = int_to_ptr.vmem [resolvable:$true] %s15
      %18 = dma.hbm_to_vmem [thread:$0]  %s14, 256, %s16, [#allocation3]
    $region5: #{tpu_custom_call.1} parent=1 // pred_fallthru
      _
    // Predicated region
    $region6: #{tpu_custom_call.1} parent=1 // pred_check
      _
    $region7: #{tpu_custom_call.1} parent=1 // pred_check_branch
      %20 = sbr.rel (0) target = $region9
    $region8: #{tpu_custom_call.1} parent=1 // pred_region
      %22 = dma.done [#allocation3], 256
    $region9: #{tpu_custom_call.1} parent=1 // pred_fallthru
      _
    %v23 = vld [vmem:[#allocation2] sm:$0xff]
    %v24 = vld [vmem:[#allocation2 + $0x8] sm:$0xff]
    %v25 = vadd.f32 %v23, %v24
    %26 = vadd.xlane.f32.xlu0 %v25
    %v27 = vpop.xlane.xlu0 %26
    %v28 = vrcp.pop 256.0
    %v29 = vmul.f32 256.0, %v28
    %v30 = vsub.f32 1.0, %v29
    %v31 = vmul.f32 %v28, %v30
    %v32 = vadd.f32 %v28, %v31
    %vm33 = vweird.f32 %v28
    %v34 = vsel %vm33, %v28, %v32
    %v35 = vmul.f32 %v27, %v34
    %v36 = vrcp.pop %v35
    %v37 = vmul.f32 %v35, %v36
    %v38 = vsub.f32 1.0, %v37
    %v39 = vmul.f32 %v36, %v38
    %v40 = vadd.f32 %v36, %v39
    %vm41 = vweird.f32 %v35
    %vm42 = vweird.f32 %v36
    %vm43 = vmor %vm41, %vm42
    %v44 = vsel %vm43, %v36, %v40
    %v45 = vand.u32 2147483647, %v35
    %vm46 = vcmp.eq.f32.partialorder %v45, 8.507059e+37
    %v47 = vand.u32 %v35, 2147483648
    %v48 = vor.u32 1.1754944e-38, %v47
    %v49 = vsel %vm46, %v48, %v44
    %v50 = vmul.f32 0.345239, %v49
    %v51 = vmul.f32 %v23, %v50
    %v52 = vmul.f32 %v24, %v50
    %v53 = vmin.f32 %v51, 0.76040256
    %v54 = vmin.f32 %v52, 0.76040256
    %v55 = vmax.f32 %v53, -0.4261092
    %v56 = vmax.f32 %v54, -0.4261092
    %57 = vst [vmem:[#allocation5] sm:$0xff] %v55
    %58 = vst [vmem:[#allocation5 + $0x8] sm:$0xff] %v56
    // Predicated region
    $region10: #{tpu_custom_call.1} parent=1 // pred_check
      _
    $region11: #{tpu_custom_call.1} parent=1 // pred_check_branch
      %60 = sbr.rel (0) target = $region13
    $region12: #{tpu_custom_call.1} parent=1 // pred_region
      %62 = vsyncadd [#allocation4], 0
      %s64 = sshll.u32 [#allocation5], 4
      %s65 = int_to_ptr.vmem [resolvable:$true] %s64
      %s66 = sshll.u32 %s1, 4
      %s67 = int_to_ptr.hbm [resolvable:$true] %s66
      %69 = dma.vmem_to_hbm [thread:$0]  %s65, 256, %s67, [#allocation4]
    $region13: #{tpu_custom_call.1} parent=1 // pred_fallthru
      _
    // Predicated region
    $region14: #{tpu_custom_call.1} parent=1 // pred_check
      _
    $region15: #{tpu_custom_call.1} parent=1 // pred_check_branch
      %71 = sbr.rel (0) target = $region17
    $region16: #{tpu_custom_call.1} parent=1 // pred_region
      %73 = dma.done [#allocation4], 256
    $region17: #{tpu_custom_call.1} parent=1 // pred_fallthru
      _
    %74 = vsyncpa [#allocation3], 1
    %75 = vsyncpa [#allocation4], 1

</llo_original>
